<compile_context>
chip_gen: v7x
topology: tpu7x:2x2x1
jax: 0.10.0
libtpu: 0.0.40
codegen_flags: <defaults>
</compile_context>

<pallas_src>
import functools
import math

import jax
import jax.numpy as jnp
from jax.experimental import pallas as pl
from jax.experimental.pallas import tpu as pltpu


def _concat_dma_kernel(*refs, inner_sizes):
    """refs = (*in_hbm_refs, out_hbm_ref, dma_sems).

    Input i has shape (outer, inner_sizes[i]) and is DMA'd directly into the
    output slice out[:, offset_i : offset_i + inner_sizes[i]].  All DMAs are
    started first (so they overlap) and waited on afterwards.
    """
    sems = refs[-1]
    out_ref = refs[-2]
    in_refs = refs[:-2]

    copies = []
    offset = 0
    for i, (src, sz) in enumerate(zip(in_refs, inner_sizes)):
        cp = pltpu.make_async_copy(
            src, out_ref.at[:, pl.ds(offset, sz)], sems.at[i]
        )
        cp.start()
        copies.append(cp)
        offset += sz
    for cp in copies:
        cp.wait()


def concat(xs, dimension=1):
    """Pallas equivalent of torch.cat(xs, dim=dimension)."""
    xs = list(xs)
    assert len(xs) >= 1, "torch.cat requires a non-empty sequence"
    ndim = xs[0].ndim
    d = dimension % ndim  # normalize negative dims, torch-style
    dtype = xs[0].dtype
    base = xs[0].shape
    for x in xs:
        assert x.ndim == ndim and x.dtype == dtype
        for ax in range(ndim):
            if ax != d:
                assert x.shape[ax] == base[ax], (x.shape, base)

    out_shape = list(base)
    out_shape[d] = sum(x.shape[d] for x in xs)
    out_shape = tuple(out_shape)

    # Fast path: concatenating a single tensor is the identity (JAX arrays are
    # immutable, so no defensive copy is needed).
    if len(xs) == 1:
        return xs[0]

    # Row-major layout: concat along axis d == per-"outer"-row concatenation
    # of the flattened trailing block (d, d+1, ..., ndim-1).  The reshapes in
    # the wrapper are free (metadata only) for contiguous row-major arrays.
    outer = math.prod(base[:d]) if d > 0 else 1
    inner_sizes_all = [math.prod(x.shape[d:]) for x in xs]
    total_inner = sum(inner_sizes_all)

    # Drop inputs that are empty along the concat axis: they contribute no
    # bytes and zero-length DMAs would only add descriptor overhead.
    nonempty = [(x, s) for x, s in zip(xs, inner_sizes_all) if s > 0]
    if not nonempty:
        return jnp.zeros(out_shape, dtype=dtype)
    flat = [x.reshape(outer, s) for x, s in nonempty]
    inner_sizes = tuple(s for _, s in nonempty)

    out_flat = pl.pallas_call(
        functools.partial(_concat_dma_kernel, inner_sizes=inner_sizes),
        out_shape=jax.ShapeDtypeStruct((outer, total_inner), dtype),
        in_specs=[pl.BlockSpec(memory_space=pl.ANY) for _ in flat],
        out_specs=pl.BlockSpec(memory_space=pl.ANY),
        scratch_shapes=[pltpu.SemaphoreType.DMA((len(flat),))],
    )(*flat)

    return out_flat.reshape(out_shape)


class Concat:
    """Mirror of the PyTorch module interface (no parameters)."""

    def __init__(self, dimension=1):
        self.d = dimension

    def __call__(self, x):
        return concat(x, self.d)


if __name__ == "__main__":
    key = jax.random.PRNGKey(0)
    k1, k2, k3 = jax.random.split(key, 3)

    # Small NCHW inputs with differing channel counts, as a YOLOv5 neck would feed.
    x1 = jax.random.normal(k1, (2, 4, 16, 16), dtype=jnp.float32)
    x2 = jax.random.normal(k2, (2, 6, 16, 16), dtype=jnp.float32)
    x3 = jax.random.normal(k3, (2, 2, 16, 16), dtype=jnp.float32)

    module = Concat(dimension=1)
    out = jax.block_until_ready(module([x1, x2, x3]))
    ref = jnp.concatenate([x1, x2, x3], axis=1)
    assert out.shape == ref.shape, (out.shape, ref.shape)
    assert jnp.array_equal(out, ref), "Pallas concat mismatch vs jnp.concatenate"

    # DMA path is dtype-agnostic: bf16 sanity check on the same shapes.
    y1, y2, y3 = (t.astype(jnp.bfloat16) for t in (x1, x2, x3))
    out_bf16 = jax.block_until_ready(Concat(1)([y1, y2, y3]))
    ref_bf16 = jnp.concatenate([y1, y2, y3], axis=1)
    assert jnp.array_equal(out_bf16, ref_bf16), "bf16 concat mismatch"

    # Concat along dim=0 exercises the fully contiguous (outer == 1) path.
    out_d0 = jax.block_until_ready(Concat(0)([x1, x1]))
    ref_d0 = jnp.concatenate([x1, x1], axis=0)
    assert jnp.array_equal(out_d0, ref_d0), "dim=0 concat mismatch"

    # Negative dim (torch-style) exercises the strided per-row DMA path.
    out_dm1 = jax.block_until_ready(Concat(-1)([x1, x1]))
    ref_dm1 = jnp.concatenate([x1, x1], axis=-1)
    assert jnp.array_equal(out_dm1, ref_dm1), "dim=-1 concat mismatch"

    print("KERNEL_OK")
</pallas_src>

<mosaic_0001>
module attributes {stable_mosaic.version = 11 : i64} {
  func.func @_concat_dma_kernel(%arg0: memref<2x1024xf32, #tpu.memory_space<any>>, %arg1: memref<2x1536xf32, #tpu.memory_space<any>>, %arg2: memref<2x512xf32, #tpu.memory_space<any>>, %arg3: memref<2x3072xf32, #tpu.memory_space<any>>, %arg4: memref<3x!tpu.dma_semaphore, #tpu.memory_space<semaphore_mem>>) attributes {dimension_semantics = [], scalar_prefetch = 0 : i64, scratch_operands = 1 : i64, tpu.core_type = #tpu.core_type<tc>} {
    %c0_i32 = arith.constant 0 : i32
    %c0_i32_0 = arith.constant 0 : i32
    %c0_i32_1 = arith.constant 0 : i32
    %0 = tpu.memref_slice %arg3[%c0_i32_0, %c0_i32_1] : memref<2x3072xf32, #tpu.memory_space<any>> -> memref<2x1024xf32, #tpu.memory_space<any>>
    %1 = tpu.memref_slice %arg4[%c0_i32] : memref<3x!tpu.dma_semaphore, #tpu.memory_space<semaphore_mem>> -> memref<1x!tpu.dma_semaphore, #tpu.memory_space<semaphore_mem>>
    %2 = tpu.memref_squeeze %1 : memref<1x!tpu.dma_semaphore, #tpu.memory_space<semaphore_mem>> -> memref<!tpu.dma_semaphore, #tpu.memory_space<semaphore_mem>>
    tpu.enqueue_dma source(%arg0 : memref<2x1024xf32, #tpu.memory_space<any>>) target(%0 : memref<2x1024xf32, #tpu.memory_space<any>>) target_semaphore(%2 : memref<!tpu.dma_semaphore, #tpu.memory_space<semaphore_mem>>)
    %c1_i32 = arith.constant 1 : i32
    %c0_i32_2 = arith.constant 0 : i32
    %c1024_i32 = arith.constant 1024 : i32
    %3 = tpu.memref_slice %arg3[%c0_i32_2, %c1024_i32] : memref<2x3072xf32, #tpu.memory_space<any>> -> memref<2x1536xf32, #tpu.memory_space<any>>
    %4 = tpu.memref_slice %arg4[%c1_i32] : memref<3x!tpu.dma_semaphore, #tpu.memory_space<semaphore_mem>> -> memref<1x!tpu.dma_semaphore, #tpu.memory_space<semaphore_mem>>
    %5 = tpu.memref_squeeze %4 : memref<1x!tpu.dma_semaphore, #tpu.memory_space<semaphore_mem>> -> memref<!tpu.dma_semaphore, #tpu.memory_space<semaphore_mem>>
    tpu.enqueue_dma source(%arg1 : memref<2x1536xf32, #tpu.memory_space<any>>) target(%3 : memref<2x1536xf32, #tpu.memory_space<any>>) target_semaphore(%5 : memref<!tpu.dma_semaphore, #tpu.memory_space<semaphore_mem>>)
    %c2_i32 = arith.constant 2 : i32
    %c0_i32_3 = arith.constant 0 : i32
    %c2560_i32 = arith.constant 2560 : i32
    %6 = tpu.memref_slice %arg3[%c0_i32_3, %c2560_i32] : memref<2x3072xf32, #tpu.memory_space<any>> -> memref<2x512xf32, #tpu.memory_space<any>>
    %7 = tpu.memref_slice %arg4[%c2_i32] : memref<3x!tpu.dma_semaphore, #tpu.memory_space<semaphore_mem>> -> memref<1x!tpu.dma_semaphore, #tpu.memory_space<semaphore_mem>>
    %8 = tpu.memref_squeeze %7 : memref<1x!tpu.dma_semaphore, #tpu.memory_space<semaphore_mem>> -> memref<!tpu.dma_semaphore, #tpu.memory_space<semaphore_mem>>
    tpu.enqueue_dma source(%arg2 : memref<2x512xf32, #tpu.memory_space<any>>) target(%6 : memref<2x512xf32, #tpu.memory_space<any>>) target_semaphore(%8 : memref<!tpu.dma_semaphore, #tpu.memory_space<semaphore_mem>>)
    %c0_i32_4 = arith.constant 0 : i32
    %c0_i32_5 = arith.constant 0 : i32
    %c0_i32_6 = arith.constant 0 : i32
    %9 = tpu.memref_slice %arg3[%c0_i32_5, %c0_i32_6] : memref<2x3072xf32, #tpu.memory_space<any>> -> memref<2x1024xf32, #tpu.memory_space<any>>
    %10 = tpu.memref_slice %arg4[%c0_i32_4] : memref<3x!tpu.dma_semaphore, #tpu.memory_space<semaphore_mem>> -> memref<1x!tpu.dma_semaphore, #tpu.memory_space<semaphore_mem>>
    %11 = tpu.memref_squeeze %10 : memref<1x!tpu.dma_semaphore, #tpu.memory_space<semaphore_mem>> -> memref<!tpu.dma_semaphore, #tpu.memory_space<semaphore_mem>>
    tpu.wait_dma2 semaphore(%11 : memref<!tpu.dma_semaphore, #tpu.memory_space<semaphore_mem>>) src(%arg0 : memref<2x1024xf32, #tpu.memory_space<any>>) dst(%9 : memref<2x1024xf32, #tpu.memory_space<any>>)
    %c1_i32_7 = arith.constant 1 : i32
    %c0_i32_8 = arith.constant 0 : i32
    %c1024_i32_9 = arith.constant 1024 : i32
    %12 = tpu.memref_slice %arg3[%c0_i32_8, %c1024_i32_9] : memref<2x3072xf32, #tpu.memory_space<any>> -> memref<2x1536xf32, #tpu.memory_space<any>>
    %13 = tpu.memref_slice %arg4[%c1_i32_7] : memref<3x!tpu.dma_semaphore, #tpu.memory_space<semaphore_mem>> -> memref<1x!tpu.dma_semaphore, #tpu.memory_space<semaphore_mem>>
    %14 = tpu.memref_squeeze %13 : memref<1x!tpu.dma_semaphore, #tpu.memory_space<semaphore_mem>> -> memref<!tpu.dma_semaphore, #tpu.memory_space<semaphore_mem>>
    tpu.wait_dma2 semaphore(%14 : memref<!tpu.dma_semaphore, #tpu.memory_space<semaphore_mem>>) src(%arg1 : memref<2x1536xf32, #tpu.memory_space<any>>) dst(%12 : memref<2x1536xf32, #tpu.memory_space<any>>)
    %c2_i32_10 = arith.constant 2 : i32
    %c0_i32_11 = arith.constant 0 : i32
    %c2560_i32_12 = arith.constant 2560 : i32
    %15 = tpu.memref_slice %arg3[%c0_i32_11, %c2560_i32_12] : memref<2x3072xf32, #tpu.memory_space<any>> -> memref<2x512xf32, #tpu.memory_space<any>>
    %16 = tpu.memref_slice %arg4[%c2_i32_10] : memref<3x!tpu.dma_semaphore, #tpu.memory_space<semaphore_mem>> -> memref<1x!tpu.dma_semaphore, #tpu.memory_space<semaphore_mem>>
    %17 = tpu.memref_squeeze %16 : memref<1x!tpu.dma_semaphore, #tpu.memory_space<semaphore_mem>> -> memref<!tpu.dma_semaphore, #tpu.memory_space<semaphore_mem>>
    tpu.wait_dma2 semaphore(%17 : memref<!tpu.dma_semaphore, #tpu.memory_space<semaphore_mem>>) src(%arg2 : memref<2x512xf32, #tpu.memory_space<any>>) dst(%15 : memref<2x512xf32, #tpu.memory_space<any>>)
    return
  }
}

</mosaic_0001>

<llo_original>
// kernel: tpu_custom_call.1
$region0: #{tpu_custom_call.1}
  #allocation0 [shape = 'u32[]', space=smem, size = 0x4, offset = 0x4, fixed_abs, tag = 'smem constant byte address 0x4 - core index']
  #allocation1 [shape = 'u32[144,128]{1,0:T(1,128)}', space=vmem, size = 0x12000, scoped, tag = 'internal scratch']
  #allocation2 [shape = 's32[3]{0}', space=sflag, size = 0xc, scoped, tag = 'scratch operand']
  #allocation3 [shape = 's32[]', space=sflag, size = 0x4, offset = 0, fixed_abs, tag = 'sflag constant byte address 0x0 - dummy sync flag']
  #allocation4 [shape = 'u32[0]{0}', space=smem, size = 0, offset = 0, fixed_abs, tag = 'smem constant byte address 0x0 - null']
  #allocation5 [shape = 's32[]', space=sflag, size = 0x4, offset = 0, fixed_abs, tag = 'sflag constant byte address 0x0 - dummy sync flag']
  #allocation6 [shape = 'u32[0]{0}', space=smem, size = 0, offset = 0, fixed_abs, tag = 'smem constant byte address 0x0 - null']
  #allocation7 [shape = 's32[]', space=sflag, size = 0x4, offset = 0, fixed_abs, tag = 'sflag constant byte address 0x0 - dummy sync flag']
  #allocation8 [shape = 'u32[0]{0}', space=smem, size = 0, offset = 0, fixed_abs, tag = 'smem constant byte address 0x0 - null']
  %s0 = inlined_call_operand.hbm [shape: f32[2,1024], index: 0, kind: input, shape index: {}]
  %s1 = inlined_call_operand.hbm [shape: f32[2,1536], index: 1, kind: input, shape index: {}]
  %s2 = inlined_call_operand.hbm [shape: f32[2,512], index: 2, kind: input, shape index: {}]
  %s3 = inlined_call_operand.hbm [shape: f32[2,3072], index: 3, kind: output, shape index: {}]
  %s4 = sld [smem:[#allocation0]]
  $region2: #{tpu_custom_call.1} parent=0
    _
  %s6 = ssub.s32 1, %s4
  %s7 = scalar_select 0, %s6, %s4
  %s9 = sshll.u32 1, 14
  %s10 = sxor.u32 4294967295, %s9
  %s13 = sshll.u32 3, 24
  %s14 = sxor.u32 4294967295, %s13
  %s15 = sand.u32 0, %s14
  %s17 = sor.u32 %s15, 0
  %20 = dma.general %s0, 256, %s3, [#allocation2], [#allocation3], [#allocation4], %s17, 0
  %s21 = scalar_lea.hbm %s3, 256
  %s22 = scalar_lea.sflag [#allocation2], 1
  %s24 = sshll.u32 1, 14
  %s25 = sxor.u32 4294967295, %s24
  %s28 = sshll.u32 3, 24
  %s29 = sxor.u32 4294967295, %s28
  %s30 = sand.u32 0, %s29
  %s32 = sor.u32 %s30, 0
  %35 = dma.general %s1, 384, %s21, %s22, [#allocation5], [#allocation6], %s32, 0
  %s36 = scalar_lea.hbm %s3, 640
  %s37 = scalar_lea.sflag [#allocation2], 2
  %s39 = sshll.u32 1, 14
  %s40 = sxor.u32 4294967295, %s39
  %s43 = sshll.u32 3, 24
  %s44 = sxor.u32 4294967295, %s43
  %s45 = sand.u32 0, %s44
  %s47 = sor.u32 %s45, 0
  %50 = dma.general %s2, 128, %s36, %s37, [#allocation7], [#allocation8], %s47, 0
  %s51 = smul.u32 2, 1
  %s52 = smul.u32 %s51, 8
  %s53 = sshll.u32 %s52, 4
  %54 = dma.done [#allocation2], %s53
  %s55 = smul.u32 %s51, 12
  %s56 = sshll.u32 %s55, 4
  %57 = dma.done %s22, %s56
  %s58 = smul.u32 %s51, 4
  %s59 = sshll.u32 %s58, 4
  %60 = dma.done %s37, %s59
  %61 = vsyncmov [#allocation2]
  %s62 = vpop.sfrf %61
  %p63 = scmp.eq.s32.totalorder %s62, 0
  %p64 = pneg %p63
  %66 = shalt.err (%p64)
  %s67 = scalar_lea.sflag [#allocation2], 1
  %68 = vsyncmov %s67
  %s69 = vpop.sfrf %68
  %p70 = scmp.eq.s32.totalorder %s69, 0
  %p71 = pneg %p70
  %73 = shalt.err (%p71)
  %s74 = scalar_lea.sflag [#allocation2], 2
  %75 = vsyncmov %s74
  %s76 = vpop.sfrf %75
  %p77 = scmp.eq.s32.totalorder %s76, 0
  %p78 = pneg %p77
  %80 = shalt.err (%p78)

</llo_original>
